<compile_context>
chip_gen: v7x
topology: tpu7x:2x2x1
jax: 0.10.0
libtpu: 0.0.40
codegen_flags: <defaults>
</compile_context>

<pallas_src>
import functools

import jax
import jax.numpy as jnp
import numpy as np
from jax import lax
from jax.experimental import pallas as pl
from jax.experimental.pallas import tpu as pltpu


# ----------------------------------------------------------------------------
# Pallas kernel: lane-dense conv GEMM + streamed stats + fused AdaIN/LeakyReLU.
# ----------------------------------------------------------------------------
def _conv_adain_kernel(pt_ref,      # (1, K_pad, s_tile)      bf16 im2col columns (transposed)
                       wt_ref,      # (Cout_blk, K_pad)       bf16 conv weight (GEMM form)
                       scale_ref,   # (1, Cout_blk, 1)        f32  2 + gamma_layer(style)
                       beta_ref,    # (1, Cout_blk, 1)        f32  beta_layer(style)
                       out_ref,     # (1, Cout_blk, S_pad)    f32, resident across the S axis
                       sum_ref,     # (Cout_blk, 1)           f32 scratch: running sum
                       sq_ref,      # (Cout_blk, 1)           f32 scratch: running sum of squares
                       *, s_true):  # true (unpadded) spatial size, as a python float
    s = pl.program_id(2)
    n_s = pl.num_programs(2)
    s_tile = pt_ref.shape[-1]

    @pl.when(s == 0)
    def _():
        sum_ref[...] = jnp.zeros_like(sum_ref)
        sq_ref[...] = jnp.zeros_like(sq_ref)

    # Conv-as-GEMM on the MXU: (Cout_blk, K_pad) @ (K_pad, s_tile) -> f32 (Cout_blk, s_tile).
    conv = jnp.dot(wt_ref[...], pt_ref[0], preferred_element_type=jnp.float32)

    # Lane-dense store into the VMEM-resident per-(sample, channel-block) slab.
    off = pl.multiple_of(s * s_tile, 128)
    out_ref[0, :, pl.ds(off, s_tile)] = conv

    # Stream per-channel statistics while the tile is still in vregs.  Padded im2col
    # columns are zero (and the conv has no bias), so they contribute nothing here.
    sum_ref[...] += jnp.sum(conv, axis=1, keepdims=True)
    sq_ref[...] += jnp.sum(conv * conv, axis=1, keepdims=True)

    # Last S tile: fused instance-norm + AdaIN affine + LeakyReLU(0.2), one pass over
    # the resident block.  torch.var default is unbiased (ddof=1); degenerate S == 1
    # would divide by zero (matches the reference's NaN behavior).
    @pl.when(s == n_s - 1)
    def _():
        mean = sum_ref[...] * (1.0 / s_true)                                   # (Cout_blk, 1)
        var = (sq_ref[...] - s_true * mean * mean) * (1.0 / (s_true - 1.0))    # (Cout_blk, 1)
        a = lax.rsqrt(var + 1e-5) * scale_ref[0]                               # (Cout_blk, 1)
        b = beta_ref[0] - mean * a                                             # (Cout_blk, 1)
        z = out_ref[0] * a + b                                                 # broadcast over S
        out_ref[0] = jnp.where(z >= 0, z, 0.2 * z)


# ----------------------------------------------------------------------------
# Wrapper: NCDHW in/out.  XLA glue = transposed im2col + tiny style Linears.
# ----------------------------------------------------------------------------
def _round_up(x, m):
    return (x + m - 1) // m * m


def _pick_s_tile(s_total):
    """Return (s_tile, S_pad).  Never tile below 512 lanes; pad S when needed."""
    if s_total % 1024 == 0:
        return 1024, s_total
    if s_total % 512 == 0:
        return 512, s_total
    return 512, _round_up(s_total, 512)


def _pick_cout_block(cout):
    return 128 if cout % 128 == 0 else cout


@jax.jit
def conv_adain_block(x_ncdhw, style, params):
    N, Cin, D, H, W = x_ncdhw.shape
    Do, Ho, Wo = (D - 1) // 2 + 1, (H - 1) // 2 + 1, (W - 1) // 2 + 1
    S = Do * Ho * Wo
    K = 27 * Cin
    K_pad = _round_up(K, 128)
    if K_pad > 128 and K_pad % 256 != 0:
        K_pad = _round_up(K, 256)        # 256-wide contraction path on v6e/v7x
    Cout = params["conv_w"].shape[-1]

    s_tile, S_pad = _pick_s_tile(S)
    st = S_pad // s_tile
    cout_blk = _pick_cout_block(Cout)
    n_cblk = Cout // cout_blk

    # ---- transposed im2col (tap-major, channel-minor rows), bf16 ----
    xb = x_ncdhw.astype(jnp.bfloat16)
    xpad = jnp.pad(xb, ((0, 0), (0, 0), (1, 1), (1, 1), (1, 1)))     # (N,Cin,Dp,Hp,Wp)
    rows = []
    for kd in range(3):
        for kh in range(3):
            for kw in range(3):
                sl = lax.slice(
                    xpad,
                    (0, 0, kd, kh, kw),
                    (N, Cin, kd + 2 * Do - 1, kh + 2 * Ho - 1, kw + 2 * Wo - 1),
                    strides=(1, 1, 2, 2, 2),
                ).reshape(N, Cin, S)                                  # (N,Cin,S)
                if S_pad > S:
                    sl = jnp.pad(sl, ((0, 0), (0, 0), (0, S_pad - S)))
                rows.append(sl)
    if K_pad > K:   # fold the K padding into the concat (no second full-tensor pad pass)
        rows.append(jnp.zeros((N, K_pad - K, S_pad), jnp.bfloat16))
    patches_t = jnp.concatenate(rows, axis=1)                         # (N, K_pad, S_pad) bf16

    # conv weight (3,3,3,Cin,Cout) -> (Cout, K_pad), same row ordering as patches_t.
    w_t = jnp.transpose(params["conv_w"], (4, 0, 1, 2, 3)).reshape(Cout, K)
    w_t = jnp.pad(w_t, ((0, 0), (0, K_pad - K))).astype(jnp.bfloat16)
    # NOTE: conv bias intentionally unused — a per-channel constant cancels exactly in
    # the instance normalization that follows.

    # ---- style affine, hoisted out of the kernel ----
    # Module does x * (1 + gamma) with gamma = 1 + gamma_layer(style)
    # => effective scale = 2 + gamma_layer(style).
    scale = (2.0 + style @ params["gamma_w"] + params["gamma_b"]).astype(jnp.float32)
    beta = (style @ params["beta_w"] + params["beta_b"]).astype(jnp.float32)
    scale = scale[:, :, None]                                         # (N, Cout, 1)
    beta = beta[:, :, None]

    # ---- explicit VMEM budget (double-buffered blocks + scratch + headroom) ----
    vmem_need = (2 * cout_blk * S_pad * 4          # resident output block
                 + 2 * K_pad * s_tile * 2          # patches tiles
                 + 2 * cout_blk * K_pad * 2        # weight tiles
                 + 8 * cout_blk * 128 * 4          # scale/beta/scratch (lane-padded)
                 + (2 << 20))                      # headroom
    vmem_limit = int(min(max(vmem_need, 16 << 20), 48 << 20))

    out = pl.pallas_call(
        functools.partial(_conv_adain_kernel, s_true=float(S)),
        out_shape=jax.ShapeDtypeStruct((N, Cout, S_pad), jnp.float32),
        grid_spec=pltpu.PrefetchScalarGridSpec(
            num_scalar_prefetch=0,
            grid=(N, n_cblk, st),
            in_specs=[
                pl.BlockSpec((1, K_pad, s_tile), lambda n, c, s: (n, 0, s)),
                pl.BlockSpec((cout_blk, K_pad), lambda n, c, s: (c, 0)),
                pl.BlockSpec((1, cout_blk, 1), lambda n, c, s: (n, c, 0)),
                pl.BlockSpec((1, cout_blk, 1), lambda n, c, s: (n, c, 0)),
            ],
            # Same block index across the S axis -> output block stays resident in VMEM.
            out_specs=pl.BlockSpec((1, cout_blk, S_pad), lambda n, c, s: (n, c, 0)),
            scratch_shapes=[pltpu.VMEM((cout_blk, 1), jnp.float32),
                            pltpu.VMEM((cout_blk, 1), jnp.float32)],
        ),
        compiler_params=pltpu.CompilerParams(
            dimension_semantics=("parallel", "parallel", "arbitrary"),
            vmem_limit_bytes=vmem_limit),
    )(patches_t, w_t, scale, beta)

    # Channel-major output: drop the S padding (if any) and reshape — no transpose.
    if S_pad != S:
        out = out[:, :, :S]
    return out.reshape(N, Cout, Do, Ho, Wo)


# ----------------------------------------------------------------------------
# Pure-JAX reference (mirrors the PyTorch forward). Conv inputs are cast to bf16
# (f32 accumulation) to mirror the kernel's MXU precision so the check stays tight.
# ----------------------------------------------------------------------------
def reference_forward(x_ncdhw, style, params):
    y = lax.conv_general_dilated(
        x_ncdhw.astype(jnp.bfloat16), params["conv_w"].astype(jnp.bfloat16),
        window_strides=(2, 2, 2), padding=[(1, 1)] * 3,
        dimension_numbers=("NCDHW", "DHWIO", "NCDHW"),
        preferred_element_type=jnp.float32)
    y = y + params["conv_b"][None, :, None, None, None]
    mean = jnp.mean(y, axis=(2, 3, 4), keepdims=True)
    var = jnp.var(y, axis=(2, 3, 4), keepdims=True, ddof=1)          # torch.var: unbiased
    yn = (y - mean) / jnp.sqrt(var + 1e-5)
    gamma = 1.0 + (style @ params["gamma_w"] + params["gamma_b"])    # (N, Cout)
    beta = style @ params["beta_w"] + params["beta_b"]
    out = yn * (1.0 + gamma)[:, :, None, None, None] + beta[:, :, None, None, None]
    return jnp.where(out >= 0, out, 0.2 * out)


if __name__ == "__main__":
    # Small shapes consistent with the module.
    N, Cin, Cout, style_dim = 2, 4, 8, 16
    D = H = W = 8

    key = jax.random.PRNGKey(0)
    k_x, k_s, k_w, k_b, k_gw, k_bw = jax.random.split(key, 6)

    x = jax.random.normal(k_x, (N, Cin, D, H, W), dtype=jnp.float32)
    style = jax.random.normal(k_s, (N, style_dim), dtype=jnp.float32)

    params = {
        # conv weight stored DHWIO: (3,3,3,Cin,Cout); conv bias (Cout,)
        "conv_w": jax.random.normal(k_w, (3, 3, 3, Cin, Cout), jnp.float32) * 0.05,
        "conv_b": jax.random.normal(k_b, (Cout,), jnp.float32) * 0.05,
        # Linear layers: Normal(0, 1e-4) weights, zero bias (as in __init__).
        "gamma_w": jax.random.normal(k_gw, (style_dim, Cout), jnp.float32) * 1e-4,
        "gamma_b": jnp.zeros((Cout,), jnp.float32),
        "beta_w": jax.random.normal(k_bw, (style_dim, Cout), jnp.float32) * 1e-4,
        "beta_b": jnp.zeros((Cout,), jnp.float32),
    }

    out = jax.block_until_ready(conv_adain_block(x, style, params))
    ref = jax.block_until_ready(reference_forward(x, style, params))

    # bf16 MXU inputs + EUP rsqrt + one-pass variance vs XLA sqrt/divide => small slack.
    np.testing.assert_allclose(np.asarray(out), np.asarray(ref), rtol=5e-3, atol=5e-3)

    print("KERNEL_OK")
</pallas_src>

<mosaic_0001>
module attributes {stable_mosaic.version = 11 : i64} {
  func.func @_conv_adain_kernel(%arg0: i32, %arg1: i32, %arg2: i32, %arg3: memref<1x128x512xbf16, #tpu.memory_space<vmem>>, %arg4: memref<8x128xbf16, #tpu.memory_space<vmem>>, %arg5: memref<1x8x1xf32, #tpu.memory_space<vmem>>, %arg6: memref<1x8x1xf32, #tpu.memory_space<vmem>>, %arg7: memref<1x8x512xf32, #tpu.memory_space<vmem>>, %arg8: memref<8x1xf32, #tpu.memory_space<vmem>>, %arg9: memref<8x1xf32, #tpu.memory_space<vmem>>) attributes {dimension_semantics = [#tpu.dimension_semantics<parallel>, #tpu.dimension_semantics<parallel>, #tpu.dimension_semantics<arbitrary>], iteration_bounds = array<i64: 2, 1, 1>, scalar_prefetch = 0 : i64, scratch_operands = 2 : i64, tpu.core_type = #tpu.core_type<tc>, window_params = [{transform_indices = @transform_0, window_bounds = array<i64: 1, 128, 512>}, {transform_indices = @transform_1, window_bounds = array<i64: 8, 128>}, {transform_indices = @transform_2, window_bounds = array<i64: 1, 8, 1>}, {transform_indices = @transform_3, window_bounds = array<i64: 1, 8, 1>}, {transform_indices = @transform_4, window_bounds = array<i64: 1, 8, 512>}]} {
    %c0_i32 = arith.constant 0 : i32
    %0 = arith.cmpi eq, %arg2, %c0_i32 : i32
    %1 = arith.extui %0 : i1 to i32
    %c0_i32_0 = arith.constant 0 : i32
    %2 = arith.cmpi ne, %1, %c0_i32_0 : i32
    scf.if %2 {
      %cst_19 = arith.constant 0.000000e+00 : f32
      %27 = vector.broadcast %cst_19 : f32 to vector<8x1xf32>
      %c0_20 = arith.constant 0 : index
      %c0_21 = arith.constant 0 : index
      %28 = vector.load %arg8[%c0_20, %c0_21] : memref<8x1xf32, #tpu.memory_space<vmem>>, vector<8x1xf32>
      tpu.vector_store %arg8[%c0_20, %c0_21], %27 {strides = array<i32>} : memref<8x1xf32, #tpu.memory_space<vmem>>, vector<8x1xf32>,
      %cst_22 = arith.constant 0.000000e+00 : f32
      %29 = vector.broadcast %cst_22 : f32 to vector<8x1xf32>
      %c0_23 = arith.constant 0 : index
      %c0_24 = arith.constant 0 : index
      %30 = vector.load %arg9[%c0_23, %c0_24] : memref<8x1xf32, #tpu.memory_space<vmem>>, vector<8x1xf32>
      tpu.vector_store %arg9[%c0_23, %c0_24], %29 {strides = array<i32>} : memref<8x1xf32, #tpu.memory_space<vmem>>, vector<8x1xf32>,
    } else {
    }
    %c0 = arith.constant 0 : index
    %c0_1 = arith.constant 0 : index
    %3 = vector.load %arg4[%c0, %c0_1] : memref<8x128xbf16, #tpu.memory_space<vmem>>, vector<8x128xbf16>
    %c0_2 = arith.constant 0 : index
    %c0_3 = arith.constant 0 : index
    %c0_4 = arith.constant 0 : index
    %4 = vector.load %arg3[%c0_2, %c0_3, %c0_4] : memref<1x128x512xbf16, #tpu.memory_space<vmem>>, vector<1x128x512xbf16>
    %5 = vector.shape_cast %4 : vector<1x128x512xbf16> to vector<128x512xbf16>
    %cst = arith.constant dense<0.000000e+00> : vector<8x512xf32>
    %6 = tpu.matmul %3, %5, %cst {dimension_numbers = #tpu.dot_dimension_numbers<[1], [0], [0], [1], [0, 0, 1, 1], [], []>} : vector<8x128xbf16>, vector<128x512xbf16>, vector<8x512xf32> -> vector<8x512xf32>
    %c512_i32 = arith.constant 512 : i32
    %7 = arith.muli %arg2, %c512_i32 : i32
    %8 = tpu.assume_multiple %7, 128 : i32
    %c0_5 = arith.constant 0 : index
    %c0_6 = arith.constant 0 : index
    %9 = arith.index_cast %8 : i32 to index
    %10 = vector.load %arg7[%c0_5, %c0_6, %9] : memref<1x8x512xf32, #tpu.memory_space<vmem>>, vector<1x8x512xf32>
    %11 = vector.shape_cast %10 : vector<1x8x512xf32> to vector<8x512xf32>
    %12 = vector.shape_cast %6 : vector<8x512xf32> to vector<1x8x512xf32>
    tpu.vector_store %arg7[%c0_5, %c0_6, %9], %12 {strides = array<i32>} : memref<1x8x512xf32, #tpu.memory_space<vmem>>, vector<1x8x512xf32>,
    %c0_7 = arith.constant 0 : index
    %c0_8 = arith.constant 0 : index
    %13 = vector.load %arg8[%c0_7, %c0_8] : memref<8x1xf32, #tpu.memory_space<vmem>>, vector<8x1xf32>
    %cst_9 = arith.constant dense<0.000000e+00> : vector<8xf32>
    %14 = vector.multi_reduction <add>, %6, %cst_9 [1] : vector<8x512xf32> to vector<8xf32>
    %15 = vector.shape_cast %14 : vector<8xf32> to vector<8x1xf32>
    %16 = arith.addf %13, %15 : vector<8x1xf32>
    %c0_10 = arith.constant 0 : index
    %c0_11 = arith.constant 0 : index
    %17 = vector.load %arg8[%c0_10, %c0_11] : memref<8x1xf32, #tpu.memory_space<vmem>>, vector<8x1xf32>
    tpu.vector_store %arg8[%c0_10, %c0_11], %16 {strides = array<i32>} : memref<8x1xf32, #tpu.memory_space<vmem>>, vector<8x1xf32>,
    %c0_12 = arith.constant 0 : index
    %c0_13 = arith.constant 0 : index
    %18 = vector.load %arg9[%c0_12, %c0_13] : memref<8x1xf32, #tpu.memory_space<vmem>>, vector<8x1xf32>
    %19 = arith.mulf %6, %6 : vector<8x512xf32>
    %cst_14 = arith.constant dense<0.000000e+00> : vector<8xf32>
    %20 = vector.multi_reduction <add>, %19, %cst_14 [1] : vector<8x512xf32> to vector<8xf32>
    %21 = vector.shape_cast %20 : vector<8xf32> to vector<8x1xf32>
    %22 = arith.addf %18, %21 : vector<8x1xf32>
    %c0_15 = arith.constant 0 : index
    %c0_16 = arith.constant 0 : index
    %23 = vector.load %arg9[%c0_15, %c0_16] : memref<8x1xf32, #tpu.memory_space<vmem>>, vector<8x1xf32>
    tpu.vector_store %arg9[%c0_15, %c0_16], %22 {strides = array<i32>} : memref<8x1xf32, #tpu.memory_space<vmem>>, vector<8x1xf32>,
    %c0_i32_17 = arith.constant 0 : i32
    %24 = arith.cmpi eq, %arg2, %c0_i32_17 : i32
    %25 = arith.extui %24 : i1 to i32
    %c0_i32_18 = arith.constant 0 : i32
    %26 = arith.cmpi ne, %25, %c0_i32_18 : i32
    scf.if %26 {
      %c0_19 = arith.constant 0 : index
      %c0_20 = arith.constant 0 : index
      %27 = vector.load %arg8[%c0_19, %c0_20] : memref<8x1xf32, #tpu.memory_space<vmem>>, vector<8x1xf32>
      %cst_21 = arith.constant 1.562500e-02 : f32
      %28 = vector.broadcast %cst_21 : f32 to vector<8x1xf32>
      %29 = arith.mulf %27, %28 : vector<8x1xf32>
      %c0_22 = arith.constant 0 : index
      %c0_23 = arith.constant 0 : index
      %30 = vector.load %arg9[%c0_22, %c0_23] : memref<8x1xf32, #tpu.memory_space<vmem>>, vector<8x1xf32>
      %cst_24 = arith.constant 6.400000e+01 : f32
      %31 = vector.broadcast %cst_24 : f32 to vector<8x1xf32>
      %32 = arith.mulf %31, %29 : vector<8x1xf32>
      %33 = arith.mulf %32, %29 : vector<8x1xf32>
      %34 = arith.subf %30, %33 : vector<8x1xf32>
      %cst_25 = arith.constant 0.0158730168 : f32
      %35 = vector.broadcast %cst_25 : f32 to vector<8x1xf32>
      %36 = arith.mulf %34, %35 : vector<8x1xf32>
      %cst_26 = arith.constant 9.99999974E-6 : f32
      %37 = vector.broadcast %cst_26 : f32 to vector<8x1xf32>
      %38 = arith.addf %36, %37 : vector<8x1xf32>
      %39 = math.rsqrt %38 : vector<8x1xf32>
      %c0_27 = arith.constant 0 : index
      %c0_28 = arith.constant 0 : index
      %c0_29 = arith.constant 0 : index
      %40 = vector.load %arg5[%c0_27, %c0_28, %c0_29] : memref<1x8x1xf32, #tpu.memory_space<vmem>>, vector<1x8x1xf32>
      %41 = vector.shape_cast %40 : vector<1x8x1xf32> to vector<8x1xf32>
      %42 = arith.mulf %39, %41 : vector<8x1xf32>
      %c0_30 = arith.constant 0 : index
      %c0_31 = arith.constant 0 : index
      %c0_32 = arith.constant 0 : index
      %43 = vector.load %arg6[%c0_30, %c0_31, %c0_32] : memref<1x8x1xf32, #tpu.memory_space<vmem>>, vector<1x8x1xf32>
      %44 = vector.shape_cast %43 : vector<1x8x1xf32> to vector<8x1xf32>
      %45 = arith.mulf %29, %42 : vector<8x1xf32>
      %46 = arith.subf %44, %45 : vector<8x1xf32>
      %c0_33 = arith.constant 0 : index
      %c0_34 = arith.constant 0 : index
      %c0_35 = arith.constant 0 : index
      %47 = vector.load %arg7[%c0_33, %c0_34, %c0_35] : memref<1x8x512xf32, #tpu.memory_space<vmem>>, vector<1x8x512xf32>
      %48 = vector.shape_cast %47 : vector<1x8x512xf32> to vector<8x512xf32>
      %49 = vector.broadcast %42 : vector<8x1xf32> to vector<8x512xf32>
      %50 = arith.mulf %48, %49 : vector<8x512xf32>
      %51 = vector.broadcast %46 : vector<8x1xf32> to vector<8x512xf32>
      %52 = arith.addf %50, %51 : vector<8x512xf32>
      %cst_36 = arith.constant 0.000000e+00 : f32
      %53 = vector.broadcast %cst_36 : f32 to vector<8x512xf32>
      %54 = arith.cmpf oge, %52, %53 : vector<8x512xf32>
      %cst_37 = arith.constant 2.000000e-01 : f32
      %55 = vector.broadcast %cst_37 : f32 to vector<8x512xf32>
      %56 = arith.mulf %55, %52 : vector<8x512xf32>
      %57 = arith.select %54, %52, %56 : vector<8x512xi1>, vector<8x512xf32>
      %c0_38 = arith.constant 0 : index
      %c0_39 = arith.constant 0 : index
      %c0_40 = arith.constant 0 : index
      %58 = vector.load %arg7[%c0_38, %c0_39, %c0_40] : memref<1x8x512xf32, #tpu.memory_space<vmem>>, vector<1x8x512xf32>
      %59 = vector.shape_cast %58 : vector<1x8x512xf32> to vector<8x512xf32>
      %60 = vector.shape_cast %57 : vector<8x512xf32> to vector<1x8x512xf32>
      tpu.vector_store %arg7[%c0_38, %c0_39, %c0_40], %60 {strides = array<i32>} : memref<1x8x512xf32, #tpu.memory_space<vmem>>, vector<1x8x512xf32>,
    } else {
    }
    return
  }
  func.func @transform_0(%arg0: i32, %arg1: i32, %arg2: i32) -> (i32, i32, i32) {
    %c0_i32 = arith.constant 0 : i32
    %c0_i32_0 = arith.constant 0 : i32
    return %arg0, %c0_i32, %arg2 : i32, i32, i32
  }
  func.func @transform_1(%arg0: i32, %arg1: i32, %arg2: i32) -> (i32, i32) {
    %c0_i32 = arith.constant 0 : i32
    %c0_i32_0 = arith.constant 0 : i32
    return %arg1, %c0_i32 : i32, i32
  }
  func.func @transform_2(%arg0: i32, %arg1: i32, %arg2: i32) -> (i32, i32, i32) {
    %c0_i32 = arith.constant 0 : i32
    %c0_i32_0 = arith.constant 0 : i32
    return %arg0, %arg1, %c0_i32 : i32, i32, i32
  }
  func.func @transform_3(%arg0: i32, %arg1: i32, %arg2: i32) -> (i32, i32, i32) {
    %c0_i32 = arith.constant 0 : i32
    %c0_i32_0 = arith.constant 0 : i32
    return %arg0, %arg1, %c0_i32 : i32, i32, i32
  }
  func.func @transform_4(%arg0: i32, %arg1: i32, %arg2: i32) -> (i32, i32, i32) {
    %c0_i32 = arith.constant 0 : i32
    %c0_i32_0 = arith.constant 0 : i32
    return %arg0, %arg1, %c0_i32 : i32, i32, i32
  }
}

</mosaic_0001>

<llo_original>
// kernel: conv_adain_block.1
$region0: #{conv_adain_block.1}
  #allocation0 [shape = 'u32[]', space=smem, size = 0x4, offset = 0x4, fixed_abs, tag = 'smem constant byte address 0x4 - core index']
  #allocation1 [shape = 'u32[144,128]{1,0:T(1,128)}', space=vmem, size = 0x12000, scoped, tag = 'internal scratch']
  #allocation2 [shape = 'f32[8,1]{1,0:T(8,128)}', space=vmem, size = 0x1000, scoped, tag = 'scratch operand']
  #allocation3 [shape = 'f32[8,1]{1,0:T(8,128)}', space=vmem, size = 0x1000, scoped, tag = 'scratch operand']
  %s0 = inlined_call_operand.vmem [shape: bf16[2,128,512], index: 0, kind: input, shape index: {}]
  %s1 = inlined_call_operand.vmem [shape: bf16[8,128], index: 1, kind: input, shape index: {}]
  %s2 = inlined_call_operand.vmem [shape: f32[2,8,1], index: 2, kind: input, shape index: {}]
  %s3 = inlined_call_operand.vmem [shape: f32[2,8,1], index: 3, kind: input, shape index: {}]
  %s4 = inlined_call_operand.vmem [shape: f32[2,8,512], index: 4, kind: output, shape index: {}]
  %s5 = sld [smem:[#allocation0]]
  $region57: #{conv_adain_block.1} parent=0
    _
  %s7 = ssub.s32 1, %s5
  %s8 = scalar_select 0, %s7, %s5
  loop: start=0, step=1, limit=4
  $region2: #{conv_adain_block.1} parent=0 // loop_pre_header
    _
  $region3: #{conv_adain_block.1} parent=0 // loop_header
    %s10 = sphi 0, %s14
    %p11 = scmp.ge.s32.totalorder %s10, 4
    %s17 = sphi 0, %s36
    %s18 = sphi 0, %s32
    %s19 = sphi 0, %s28
    %s20 = sphi 0, %s17
    %s21 = sphi 0, %s18
    %s22 = sphi 0, %s19
    %s23 = sphi 0, %s20
    %s24 = sphi 0, %s21
    %s25 = sphi 0, %s22
    %s41 = sphi 0, %s43
    %s44 = sphi 0, %s41
    %s45 = sphi 0, %s44
    %s61 = sphi 0, %s45
    %s67 = sphi 0, %s69
    %s70 = sphi 0, %s67
    %s71 = sphi 0, %s70
    %s87 = sphi 0, %s71
    %s95 = sphi 0, %s97
    %s98 = sphi 0, %s95
    %s99 = sphi 0, %s98
    %s115 = sphi 0, %s99
    %s123 = sphi 0, %s125
    %s126 = sphi 0, %s123
    %s127 = sphi 0, %s126
    %s143 = sphi 0, %s127
    %s151 = sphi 0, %s153
    %s154 = sphi 0, %s151
    %s155 = sphi 0, %s154
    %s171 = sphi 0, %s155
  $region4: #{conv_adain_block.1} parent=0 // loop_header_branch
    %13 = sbr.rel (%p11) target = $region8
  $region5: #{conv_adain_block.1} parent=0 // loop_body
    %s15 = ssub.s32 %s10, 1
    %s16 = ssub.s32 %s10, 2
    %s26 = sadd.s32 1, %s19
    %p27 = scmp.ge.s32.totalorder %s26, 1
    %s28 = scalar_select %p27, 0, %s26
    %s29 = sadd.s32 1, %s18
    %s30 = scalar_select %p27, %s29, %s18
    %p31 = scmp.ge.s32.totalorder %s30, 1
    %s32 = scalar_select %p31, 0, %s30
    %s33 = sadd.s32 1, %s17
    %s34 = scalar_select %p31, %s33, %s17
    %p35 = scmp.ge.s32.totalorder %s34, 2
    %s36 = scalar_select %p35, 0, %s34
    %s37 = ssub.s32 %s17, %s36
    %s38 = ssub.s32 %s19, %s28
    %s39 = sor.u32 %s37, %s38
    %p40 = scmp.eq.s32.totalorder %s39, 0
    %s42 = sadd.s32 %s41, 1
    %s43 = scalar_select %p40, %s41, %s42
    %p46 = pneg %p40
    %p47 = scmp.eq.s32.totalorder %s10, 1
    %p48 = por %p46, %p47
    %p49 = scmp.ne.s32.totalorder %s41, %s44
    %p50 = scmp.eq.s32.totalorder %s10, 0
    %p51 = por %p49, %p50
    %p52 = scmp.ne.s32.totalorder %s41, %s44
    %p53 = scmp.eq.s32.totalorder %s15, 1
    %p54 = por %p52, %p53
    %p55 = scmp.ne.s32.totalorder %s44, %s45
    %p56 = scmp.eq.s32.totalorder %s15, 0
    %p57 = por %p55, %p56
    %p58 = scmp.ne.s32.totalorder %s44, %s45
    %p59 = scmp.eq.s32.totalorder %s16, 1
    %p60 = por %p58, %p59
    %p62 = scmp.ne.s32.totalorder %s45, %s61
    %p63 = scmp.eq.s32.totalorder %s16, 0
    %p64 = por %p62, %p63
    %s65 = ssub.s32 %s18, %s32
    %p66 = scmp.eq.s32.totalorder %s65, 0
    %s68 = sadd.s32 %s67, 1
    %s69 = scalar_select %p66, %s67, %s68
    %p72 = pneg %p66
    %p73 = scmp.eq.s32.totalorder %s10, 1
    %p74 = por %p72, %p73
    %p75 = scmp.ne.s32.totalorder %s67, %s70
    %p76 = scmp.eq.s32.totalorder %s10, 0
    %p77 = por %p75, %p76
    %p78 = scmp.ne.s32.totalorder %s67, %s70
    %p79 = scmp.eq.s32.totalorder %s15, 1
    %p80 = por %p78, %p79
    %p81 = scmp.ne.s32.totalorder %s70, %s71
    %p82 = scmp.eq.s32.totalorder %s15, 0
    %p83 = por %p81, %p82
    %p84 = scmp.ne.s32.totalorder %s70, %s71
    %p85 = scmp.eq.s32.totalorder %s16, 1
    %p86 = por %p84, %p85
    %p88 = scmp.ne.s32.totalorder %s71, %s87
    %p89 = scmp.eq.s32.totalorder %s16, 0
    %p90 = por %p88, %p89
    %s91 = ssub.s32 %s17, %s36
    %s92 = ssub.s32 %s18, %s32
    %s93 = sor.u32 %s91, %s92
    %p94 = scmp.eq.s32.totalorder %s93, 0
    %s96 = sadd.s32 %s95, 1
    %s97 = scalar_select %p94, %s95, %s96
    %p100 = pneg %p94
    %p101 = scmp.eq.s32.totalorder %s10, 1
    %p102 = por %p100, %p101
    %p103 = scmp.ne.s32.totalorder %s95, %s98
    %p104 = scmp.eq.s32.totalorder %s10, 0
    %p105 = por %p103, %p104
    %p106 = scmp.ne.s32.totalorder %s95, %s98
    %p107 = scmp.eq.s32.totalorder %s15, 1
    %p108 = por %p106, %p107
    %p109 = scmp.ne.s32.totalorder %s98, %s99
    %p110 = scmp.eq.s32.totalorder %s15, 0
    %p111 = por %p109, %p110
    %p112 = scmp.ne.s32.totalorder %s98, %s99
    %p113 = scmp.eq.s32.totalorder %s16, 1
    %p114 = por %p112, %p113
    %p116 = scmp.ne.s32.totalorder %s99, %s115
    %p117 = scmp.eq.s32.totalorder %s16, 0
    %p118 = por %p116, %p117
    %s119 = ssub.s32 %s17, %s36
    %s120 = ssub.s32 %s18, %s32
    %s121 = sor.u32 %s119, %s120
    %p122 = scmp.eq.s32.totalorder %s121, 0
    %s124 = sadd.s32 %s123, 1
    %s125 = scalar_select %p122, %s123, %s124
    %p128 = pneg %p122
    %p129 = scmp.eq.s32.totalorder %s10, 1
    %p130 = por %p128, %p129
    %p131 = scmp.ne.s32.totalorder %s123, %s126
    %p132 = scmp.eq.s32.totalorder %s10, 0
    %p133 = por %p131, %p132
    %p134 = scmp.ne.s32.totalorder %s123, %s126
    %p135 = scmp.eq.s32.totalorder %s15, 1
    %p136 = por %p134, %p135
    %p137 = scmp.ne.s32.totalorder %s126, %s127
    %p138 = scmp.eq.s32.totalorder %s15, 0
    %p139 = por %p137, %p138
    %p140 = scmp.ne.s32.totalorder %s126, %s127
    %p141 = scmp.eq.s32.totalorder %s16, 1
    %p142 = por %p140, %p141
    %p144 = scmp.ne.s32.totalorder %s127, %s143
    %p145 = scmp.eq.s32.totalorder %s16, 0
    %p146 = por %p144, %p145
    %s147 = ssub.s32 %s17, %s36
    %s148 = ssub.s32 %s18, %s32
    %s149 = sor.u32 %s147, %s148
    %p150 = scmp.eq.s32.totalorder %s149, 0
    %s152 = sadd.s32 %s151, 1
    %s153 = scalar_select %p150, %s151, %s152
    %p156 = pneg %p150
    %p157 = scmp.eq.s32.totalorder %s10, 1
    %p158 = por %p156, %p157
    %p159 = scmp.ne.s32.totalorder %s151, %s154
    %p160 = scmp.eq.s32.totalorder %s10, 0
    %p161 = por %p159, %p160
    %p162 = scmp.ne.s32.totalorder %s151, %s154
    %p163 = scmp.eq.s32.totalorder %s15, 1
    %p164 = por %p162, %p163
    %p165 = scmp.ne.s32.totalorder %s154, %s155
    %p166 = scmp.eq.s32.totalorder %s15, 0
    %p167 = por %p165, %p166
    %p168 = scmp.ne.s32.totalorder %s154, %s155
    %p169 = scmp.eq.s32.totalorder %s16, 1
    %p170 = por %p168, %p169
    %p172 = scmp.ne.s32.totalorder %s155, %s171
    %p173 = scmp.eq.s32.totalorder %s16, 0
    %p174 = por %p172, %p173
    %p175 = scmp.le.s32.totalorder 1, %s10
    %p176 = scmp.lt.s32.totalorder %s10, 3
    %p177 = pnand %p175, %p176
    %p178 = pneg %p177
    // Predicated region
    $region9: #{conv_adain_block.1} parent=5 // pred_check
      _
    $region10: #{conv_adain_block.1} parent=5 // pred_check_branch
      %180 = sbr.rel (%p177) target = $region12
    $region11: #{conv_adain_block.1} parent=5 // pred_region
      %s181 = ssub.s32 %s10, 1
      // Predicated region
      $region13: #{conv_adain_block.1} parent=11 // pred_check
        %p182 = pneg %p83
      $region14: #{conv_adain_block.1} parent=11 // pred_check_branch
        %184 = sbr.rel (%p182) target = $region16
      $region15: #{conv_adain_block.1} parent=11 // pred_region
        %p185 = scmp.lt.s32.totalorder %s21, 0
        %s186 = scalar_select %p185, %s21, 0
        %s187 = smul.addr %s186, 4
        %s188 = scalar_lea.vmem %s1, %s187
      $region16: #{conv_adain_block.1} parent=11 // pred_fallthru
        _
    $region12: #{conv_adain_block.1} parent=5 // pred_fallthru
      _
    %p189 = scmp.lt.s32.totalorder %s10, 2
    // Predicated region
    $region17: #{conv_adain_block.1} parent=5 // pred_check
      %p190 = pneg %p189
    $region18: #{conv_adain_block.1} parent=5 // pred_check_branch
      %192 = sbr.rel (%p190) target = $region20
    $region19: #{conv_adain_block.1} parent=5 // pred_region
      // Predicated region
      $region21: #{conv_adain_block.1} parent=19 // pred_check
        %p193 = pneg %p51
      $region22: #{conv_adain_block.1} parent=19 // pred_check_branch
        %195 = sbr.rel (%p193) target = $region24
      $region23: #{conv_adain_block.1} parent=19 // pred_region
        %s196 = smul.u32 4, %s19
        %p197 = scmp.lt.s32.totalorder %s17, 1
        %s198 = scalar_select %p197, %s17, 1
        %p199 = scmp.lt.s32.totalorder %s196, 3
        %s200 = scalar_select %p199, %s196, 3
        %s201 = smul.addr %s198, 64
        %s202 = sadd.s32 %s200, %s201
        %s203 = smul.addr %s202, 4
        %s204 = scalar_lea.vmem %s0, %s203
        %s205 = smul.u32 4, %s19
      $region24: #{conv_adain_block.1} parent=19 // pred_fallthru
        _
      // Predicated region
      $region25: #{conv_adain_block.1} parent=19 // pred_check
        %p206 = pneg %p105
      $region26: #{conv_adain_block.1} parent=19 // pred_check_branch
        %208 = sbr.rel (%p206) target = $region28
      $region27: #{conv_adain_block.1} parent=19 // pred_region
        %p209 = scmp.lt.s32.totalorder %s17, 1
        %s210 = scalar_select %p209, %s17, 1
        %p211 = scmp.lt.s32.totalorder %s18, 0
        %s212 = scalar_select %p211, %s18, 0
        %s213 = sadd.s32 %s212, %s210
        %s214 = smul.addr %s213, 8
        %s215 = scalar_lea.vmem %s2, %s214
      $region28: #{conv_adain_block.1} parent=19 // pred_fallthru
        _
      // Predicated region
      $region29: #{conv_adain_block.1} parent=19 // pred_check
        %p216 = pneg %p133
      $region30: #{conv_adain_block.1} parent=19 // pred_check_branch
        %218 = sbr.rel (%p216) target = $region32
      $region31: #{conv_adain_block.1} parent=19 // pred_region
        %p219 = scmp.lt.s32.totalorder %s17, 1
        %s220 = scalar_select %p219, %s17, 1
        %p221 = scmp.lt.s32.totalorder %s18, 0
        %s222 = scalar_select %p221, %s18, 0
        %s223 = sadd.s32 %s222, %s220
        %s224 = smul.addr %s223, 8
        %s225 = scalar_lea.vmem %s3, %s224
      $region32: #{conv_adain_block.1} parent=19 // pred_fallthru
        _
    $region20: #{conv_adain_block.1} parent=5 // pred_fallthru
      _
    %p226 = scmp.le.s32.totalorder 1, %s10
    %p227 = scmp.lt.s32.totalorder %s10, 3
    %p228 = pnand %p226, %p227
    %p229 = pneg %p228
    // Predicated region
    $region33: #{conv_adain_block.1} parent=5 // pred_check
      _
    $region34: #{conv_adain_block.1} parent=5 // pred_check_branch
      %231 = sbr.rel (%p228) target = $region36
    $region35: #{conv_adain_block.1} parent=5 // pred_region
      %s232 = ssub.s32 %s10, 1
      %s233 = smul.u32 4, %s22
      %p234 = scmp.lt.s32.totalorder %s20, 1
      %s235 = scalar_select %p234, %s20, 1
      %p236 = scmp.lt.s32.totalorder %s233, 3
      %s237 = scalar_select %p236, %s233, 3
      %s238 = smul.addr %s235, 64
      %s239 = sadd.s32 %s237, %s238
      %s240 = smul.addr %s239, 4
      %s241 = scalar_lea.vmem %s0, %s240
      %p242 = pneg %p57
      %p243 = pneg %p54
      %p244 = scmp.lt.s32.totalorder %s21, 0
      %s245 = scalar_select %p244, %s21, 0
      %s246 = smul.addr %s245, 4
      %s247 = scalar_lea.vmem %s1, %s246
      %p248 = pneg %p83
      %p249 = pneg %p80
      %p250 = scmp.lt.s32.totalorder %s20, 1
      %s251 = scalar_select %p250, %s20, 1
      %p252 = scmp.lt.s32.totalorder %s21, 0
      %s253 = scalar_select %p252, %s21, 0
      %s254 = sadd.s32 %s253, %s251
      %s255 = smul.addr %s254, 8
      %s256 = scalar_lea.vmem %s2, %s255
      %p257 = pneg %p111
      %p258 = pneg %p108
      %p259 = scmp.lt.s32.totalorder %s20, 1
      %s260 = scalar_select %p259, %s20, 1
      %p261 = scmp.lt.s32.totalorder %s21, 0
      %s262 = scalar_select %p261, %s21, 0
      %s263 = sadd.s32 %s262, %s260
      %s264 = smul.addr %s263, 8
      %s265 = scalar_lea.vmem %s3, %s264
      %p266 = pneg %p139
      %p267 = pneg %p136
      %p268 = pneg %p167
      %p269 = pneg %p164
      %p270 = scmp.lt.s32.totalorder %s20, 1
      %s271 = scalar_select %p270, %s20, 1
      %p272 = scmp.lt.s32.totalorder %s21, 0
      %s273 = scalar_select %p272, %s21, 0
      %s274 = smul.addr %s273, 4
      %s275 = smul.addr %s271, 4
      %s276 = sadd.s32 %s274, %s275
      %s277 = smul.addr %s276, 8
      %s278 = scalar_lea.vmem %s4, %s277
      %s279 = smul.u32 4, %s22
      %p280 = scmp.lt.s32.totalorder %s20, 1
      %s281 = scalar_select %p280, %s20, 1
      %p282 = scmp.lt.s32.totalorder %s279, 3
      %s283 = scalar_select %p282, %s279, 3
      %s284 = smul.addr %s281, 64
      %s285 = sadd.s32 %s283, %s284
      %s286 = smul.addr %s285, 4
      %s287 = scalar_lea.vmem %s0, %s286
      %s288 = smul.u32 4, %s22
      %p289 = scmp.lt.s32.totalorder %s21, 0
      %s290 = scalar_select %p289, %s21, 0
      %s291 = smul.addr %s290, 4
      %s292 = scalar_lea.vmem %s1, %s291
      %p293 = scmp.lt.s32.totalorder %s20, 1
      %s294 = scalar_select %p293, %s20, 1
      %p295 = scmp.lt.s32.totalorder %s21, 0
      %s296 = scalar_select %p295, %s21, 0
      %s297 = sadd.s32 %s296, %s294
      %s298 = smul.addr %s297, 8
      %s299 = scalar_lea.vmem %s2, %s298
      %p300 = scmp.lt.s32.totalorder %s20, 1
      %s301 = scalar_select %p300, %s20, 1
      %p302 = scmp.lt.s32.totalorder %s21, 0
      %s303 = scalar_select %p302, %s21, 0
      %s304 = sadd.s32 %s303, %s301
      %s305 = smul.addr %s304, 8
      %s306 = scalar_lea.vmem %s3, %s305
      %p307 = scmp.lt.s32.totalorder %s20, 1
      %s308 = scalar_select %p307, %s20, 1
      %p309 = scmp.lt.s32.totalorder %s21, 0
      %s310 = scalar_select %p309, %s21, 0
      %s311 = smul.addr %s310, 4
      %s312 = smul.addr %s308, 4
      %s313 = sadd.s32 %s311, %s312
      %s314 = smul.addr %s313, 8
      %s315 = scalar_lea.vmem %s4, %s314
      %p317 = scmp.eq.s32.totalorder %s22, 0
      // Predicated region
      $region37: #{conv_adain_block.1} parent=35 // pred_check
        %p318 = pneg %p317
      $region38: #{conv_adain_block.1} parent=35 // pred_check_branch
        %320 = sbr.rel (%p318) target = $region40
      $region39: #{conv_adain_block.1} parent=35 // pred_region
        %vm321 = vcmask 7168
        %322 = vst.msk [vmem:[#allocation2] sm:$0xff] %vm321, 0.0
        %323 = vst.msk [vmem:[#allocation3] sm:$0xff] %vm321, 0.0
      $region40: #{conv_adain_block.1} parent=35 // pred_fallthru
        _
      %v324 = vld [vmem:[%s292] sm:$0xf]
      %v325 = vld [vmem:[%s287] sm:$0xff]
      %v326 = vld [vmem:[%s287 + $0x8] sm:$0xff]
      %v327 = vld [vmem:[%s287 + $0x10] sm:$0xff]
      %v328 = vld [vmem:[%s287 + $0x18] sm:$0xff]
      %v329 = vld [vmem:[%s287 + $0x20] sm:$0xff]
      %v330 = vld [vmem:[%s287 + $0x28] sm:$0xff]
      %v331 = vld [vmem:[%s287 + $0x30] sm:$0xff]
      %v332 = vld [vmem:[%s287 + $0x38] sm:$0xff]
      %v333 = vld [vmem:[%s287 + $0x40] sm:$0xff]
      %v334 = vld [vmem:[%s287 + $0x48] sm:$0xff]
      %v335 = vld [vmem:[%s287 + $0x50] sm:$0xff]
      %v336 = vld [vmem:[%s287 + $0x58] sm:$0xff]
      %v337 = vld [vmem:[%s287 + $0x60] sm:$0xff]
      %v338 = vld [vmem:[%s287 + $0x68] sm:$0xff]
      %v339 = vld [vmem:[%s287 + $0x70] sm:$0xff]
      %v340 = vld [vmem:[%s287 + $0x78] sm:$0xff]
      %v341 = vld [vmem:[%s287 + $0x80] sm:$0xff]
      %v342 = vld [vmem:[%s287 + $0x88] sm:$0xff]
      %v343 = vld [vmem:[%s287 + $0x90] sm:$0xff]
      %v344 = vld [vmem:[%s287 + $0x98] sm:$0xff]
      %v345 = vld [vmem:[%s287 + $0xa0] sm:$0xff]
      %v346 = vld [vmem:[%s287 + $0xa8] sm:$0xff]
      %v347 = vld [vmem:[%s287 + $0xb0] sm:$0xff]
      %v348 = vld [vmem:[%s287 + $0xb8] sm:$0xff]
      %v349 = vld [vmem:[%s287 + $0xc0] sm:$0xff]
      %v350 = vld [vmem:[%s287 + $0xc8] sm:$0xff]
      %v351 = vld [vmem:[%s287 + $0xd0] sm:$0xff]
      %v352 = vld [vmem:[%s287 + $0xd8] sm:$0xff]
      %v353 = vld [vmem:[%s287 + $0xe0] sm:$0xff]
      %v354 = vld [vmem:[%s287 + $0xe8] sm:$0xff]
      %v355 = vld [vmem:[%s287 + $0xf0] sm:$0xff]
      %v356 = vld [vmem:[%s287 + $0xf8] sm:$0xff]
      %v389 = vunpack.c.l.b16 %v325
      %v390 = vunpack.c.h.b16 %v325
      %v391 = vunpack.c.l.b16 %v326
      %v392 = vunpack.c.h.b16 %v326
      %v393 = vunpack.c.l.b16 %v327
      %v394 = vunpack.c.h.b16 %v327
      %v395 = vunpack.c.l.b16 %v328
      %v396 = vunpack.c.h.b16 %v328
      %v397 = vunpack.c.l.b16 %v329
      %v398 = vunpack.c.h.b16 %v329
      %v399 = vunpack.c.l.b16 %v330
      %v400 = vunpack.c.h.b16 %v330
      %v401 = vunpack.c.l.b16 %v331
      %v402 = vunpack.c.h.b16 %v331
      %v403 = vunpack.c.l.b16 %v332
      %v404 = vunpack.c.h.b16 %v332
      %v405 = vunpack.c.l.b16 %v333
      %v406 = vunpack.c.h.b16 %v333
      %v407 = vunpack.c.l.b16 %v334
      %v408 = vunpack.c.h.b16 %v334
      %v409 = vunpack.c.l.b16 %v335
      %v410 = vunpack.c.h.b16 %v335
      %v411 = vunpack.c.l.b16 %v336
      %v412 = vunpack.c.h.b16 %v336
      %v413 = vunpack.c.l.b16 %v337
      %v414 = vunpack.c.h.b16 %v337
      %v415 = vunpack.c.l.b16 %v338
      %v416 = vunpack.c.h.b16 %v338
      %v417 = vunpack.c.l.b16 %v339
      %v418 = vunpack.c.h.b16 %v339
      %v419 = vunpack.c.l.b16 %v340
      %v420 = vunpack.c.h.b16 %v340
      %v421 = vunpack.c.l.b16 %v341
      %v422 = vunpack.c.h.b16 %v341
      %v423 = vunpack.c.l.b16 %v342
      %v424 = vunpack.c.h.b16 %v342
      %v425 = vunpack.c.l.b16 %v343
      %v426 = vunpack.c.h.b16 %v343
      %v427 = vunpack.c.l.b16 %v344
      %v428 = vunpack.c.h.b16 %v344
      %v429 = vunpack.c.l.b16 %v345
      %v430 = vunpack.c.h.b16 %v345
      %v431 = vunpack.c.l.b16 %v346
      %v432 = vunpack.c.h.b16 %v346
      %v433 = vunpack.c.l.b16 %v347
      %v434 = vunpack.c.h.b16 %v347
      %v435 = vunpack.c.l.b16 %v348
      %v436 = vunpack.c.h.b16 %v348
      %v437 = vunpack.c.l.b16 %v349
      %v438 = vunpack.c.h.b16 %v349
      %v439 = vunpack.c.l.b16 %v350
      %v440 = vunpack.c.h.b16 %v350
      %v441 = vunpack.c.l.b16 %v351
      %v442 = vunpack.c.h.b16 %v351
      %v443 = vunpack.c.l.b16 %v352
      %v444 = vunpack.c.h.b16 %v352
      %v445 = vunpack.c.l.b16 %v353
      %v446 = vunpack.c.h.b16 %v353
      %v447 = vunpack.c.l.b16 %v354
      %v448 = vunpack.c.h.b16 %v354
      %v449 = vunpack.c.l.b16 %v355
      %v450 = vunpack.c.h.b16 %v355
      %v451 = vunpack.c.l.b16 %v356
      %v452 = vunpack.c.h.b16 %v356
      %v453 = vpack.c.b16 %v393, %v389
      %v454 = vpack.c.b16 %v394, %v390
      %v455 = vpack.c.b16 %v395, %v391
      %v456 = vpack.c.b16 %v396, %v392
      %v457 = vpack.c.b16 %v401, %v397
      %v458 = vpack.c.b16 %v402, %v398
      %v459 = vpack.c.b16 %v403, %v399
      %v460 = vpack.c.b16 %v404, %v400
      %v461 = vpack.c.b16 %v409, %v405
      %v462 = vpack.c.b16 %v410, %v406
      %v463 = vpack.c.b16 %v411, %v407
      %v464 = vpack.c.b16 %v412, %v408
      %v465 = vpack.c.b16 %v417, %v413
      %v466 = vpack.c.b16 %v418, %v414
      %v467 = vpack.c.b16 %v419, %v415
      %v468 = vpack.c.b16 %v420, %v416
      %v469 = vpack.c.b16 %v425, %v421
      %v470 = vpack.c.b16 %v426, %v422
      %v471 = vpack.c.b16 %v427, %v423
      %v472 = vpack.c.b16 %v428, %v424
      %v473 = vpack.c.b16 %v433, %v429
      %v474 = vpack.c.b16 %v434, %v430
      %v475 = vpack.c.b16 %v435, %v431
      %v476 = vpack.c.b16 %v436, %v432
      %v477 = vpack.c.b16 %v441, %v437
      %v478 = vpack.c.b16 %v442, %v438
      %v479 = vpack.c.b16 %v443, %v439
      %v480 = vpack.c.b16 %v444, %v440
      %v481 = vpack.c.b16 %v449, %v445
      %v482 = vpack.c.b16 %v450, %v446
      %v483 = vpack.c.b16 %v451, %v447
      %v484 = vpack.c.b16 %v452, %v448
      %517 = vmatprep.subr.bf16.mxu0 %v454
      %518 = vmatpush1.bf16.msra.mxu0 %v453
      %519 = vmatprep.subr.bf16.mxu0 %v458
      %520 = vmatpush1.bf16.msra.mxu0 %v457
      %521 = vmatprep.subr.bf16.mxu0 %v462
      %522 = vmatpush1.bf16.msra.mxu0 %v461
      %523 = vmatprep.subr.bf16.mxu0 %v466
      %524 = vmatpush1.bf16.msra.mxu0 %v465
      %525 = vmatprep.subr.bf16.mxu0 %v470
      %526 = vmatpush1.bf16.msra.mxu0 %v469
      %527 = vmatprep.subr.bf16.mxu0 %v474
      %528 = vmatpush1.bf16.msra.mxu0 %v473
      %529 = vmatprep.subr.bf16.mxu0 %v478
      %530 = vmatpush1.bf16.msra.mxu0 %v477
      %531 = vmatprep.subr.bf16.mxu0 %v482
      %532 = vmatpush1.bf16.msra.mxu0 %v481
      %533 = vmatprep.subr.bf16.mxu0 0
      %534 = vmatpush1.bf16.msra.mxu0 0
      %535 = vmatprep.subr.bf16.mxu0 0
      %536 = vmatpush1.bf16.msra.mxu0 0
      %537 = vmatprep.subr.bf16.mxu0 0
      %538 = vmatpush1.bf16.msra.mxu0 0
      %539 = vmatprep.subr.bf16.mxu0 0
      %540 = vmatpush1.bf16.msra.mxu0 0
      %541 = vmatprep.subr.bf16.mxu0 0
      %542 = vmatpush1.bf16.msra.mxu0 0
      %543 = vmatprep.subr.bf16.mxu0 0
      %544 = vmatpush1.bf16.msra.mxu0 0
      %545 = vmatprep.subr.bf16.mxu0 0
      %546 = vmatpush1.bf16.msra.mxu0 0
      %547 = vmatprep.subr.bf16.mxu0 0
      %548 = vmatpush1.bf16.msra.mxu0 0
      %549 = vmatprep.mubr.bf16.mxu0 0
      %550 = vmatmul.mubr.bf16.gmra.mrb[0].mxu0 %v324
      %v551 = vpop.f32.mrb[0].mxu0
      %v552 = vadd.f32 0.0, %v551
      %v553 = vpop.f32.mrb[0].mxu0
      %v554 = vadd.f32 0.0, %v553
      %v555 = vpop.f32.mrb[0].mxu0
      %v556 = vpop.f32.mrb[0].mxu0
      %557 = vdwg.mxu0
      %558 = vmatprep.subr.bf16.mxu0 %v456
      %559 = vmatpush1.bf16.msra.mxu0 %v455
      %560 = vmatprep.subr.bf16.mxu0 %v460
      %561 = vmatpush1.bf16.msra.mxu0 %v459
      %562 = vmatprep.subr.bf16.mxu0 %v464
      %563 = vmatpush1.bf16.msra.mxu0 %v463
      %564 = vmatprep.subr.bf16.mxu0 %v468
      %565 = vmatpush1.bf16.msra.mxu0 %v467
      %566 = vmatprep.subr.bf16.mxu0 %v472
      %567 = vmatpush1.bf16.msra.mxu0 %v471
      %568 = vmatprep.subr.bf16.mxu0 %v476
      %569 = vmatpush1.bf16.msra.mxu0 %v475
      %570 = vmatprep.subr.bf16.mxu0 %v480
      %571 = vmatpush1.bf16.msra.mxu0 %v479
      %572 = vmatprep.subr.bf16.mxu0 %v484
      %573 = vmatpush1.bf16.msra.mxu0 %v483
      %574 = vmatprep.subr.bf16.mxu0 0
      %575 = vmatpush1.bf16.msra.mxu0 0
      %576 = vmatprep.subr.bf16.mxu0 0
      %577 = vmatpush1.bf16.msra.mxu0 0
      %578 = vmatprep.subr.bf16.mxu0 0
      %579 = vmatpush1.bf16.msra.mxu0 0
      %580 = vmatprep.subr.bf16.mxu0 0
      %581 = vmatpush1.bf16.msra.mxu0 0
      %582 = vmatprep.subr.bf16.mxu0 0
      %583 = vmatpush1.bf16.msra.mxu0 0
      %584 = vmatprep.subr.bf16.mxu0 0
      %585 = vmatpush1.bf16.msra.mxu0 0
      %586 = vmatprep.subr.bf16.mxu0 0
      %587 = vmatpush1.bf16.msra.mxu0 0
      %588 = vmatprep.subr.bf16.mxu0 0
      %589 = vmatpush1.bf16.msra.mxu0 0
      %590 = vmatprep.mubr.bf16.mxu0 0
      %591 = vmatmul.mubr.bf16.gmra.mrb[0].mxu0 %v324
      %v592 = vpop.f32.mrb[0].mxu0
      %v593 = vadd.f32 0.0, %v592
      %v594 = vpop.f32.mrb[0].mxu0
      %v595 = vadd.f32 0.0, %v594
      %v596 = vpop.f32.mrb[0].mxu0
      %v597 = vpop.f32.mrb[0].mxu0
      %598 = vdwg.mxu0
      %s599 = smul.u32 %s22, 512
      %s600 = sshra.s32 %s599, 7
      %s601 = sand.u32 %s599, 127
      %s602 = smul.addr %s600, 8
      %s603 = scalar_lea.vmem %s315, %s602
      %604 = vst [vmem:[%s603] sm:$0xff] %v552
      %605 = vst [vmem:[%s603 + $0x8] sm:$0xff] %v554
      %606 = vst [vmem:[%s603 + $0x10] sm:$0xff] %v593
      %607 = vst [vmem:[%s603 + $0x18] sm:$0xff] %v595
      %v608 = vld [vmem:[#allocation2] sm:$0xff]
      %v609 = vadd.f32 %v552, %v554
      %v610 = vadd.f32 %v609, %v593
      %v611 = vadd.f32 %v610, %v595
      %612 = vadd.xlane.f32.xlu0 %v611
      %v613 = vpop.xlane.xlu0 %612
      %v614 = vadd.f32 %v608, %v613
      %vm615 = vcmask 7168
      %616 = vst.msk [vmem:[#allocation2] sm:$0xff] %vm615, %v614
      %v617 = vld [vmem:[#allocation3] sm:$0xff]
      %v618 = vmul.f32 %v552, %v552
      %v619 = vmul.f32 %v554, %v554
      %v620 = vmul.f32 %v593, %v593
      %v621 = vmul.f32 %v595, %v595
      %v622 = vadd.f32 %v618, %v619
      %v623 = vadd.f32 %v622, %v620
      %v624 = vadd.f32 %v623, %v621
      %625 = vadd.xlane.f32.xlu0 %v624
      %v626 = vpop.xlane.xlu0 %625
      %v627 = vadd.f32 %v617, %v626
      %628 = vst.msk [vmem:[#allocation3] sm:$0xff] %vm615, %v627
      // Predicated region
      $region41: #{conv_adain_block.1} parent=35 // pred_check
        %p629 = pneg %p317
      $region42: #{conv_adain_block.1} parent=35 // pred_check_branch
        %631 = sbr.rel (%p629) target = $region44
      $region43: #{conv_adain_block.1} parent=35 // pred_region
        %v632 = vld [vmem:[#allocation2] sm:$0xff]
        %v633 = vmul.f32 %v632, 0.015625
        %v634 = vld [vmem:[#allocation3] sm:$0xff]
        %v635 = vmul.f32 %v633, 64.0
        %v636 = vmul.f32 %v635, %v633
        %v637 = vsub.f32 %v634, %v636
        %v638 = vmul.f32 %v637, 0.015873017
        %v639 = vadd.f32 %v638, 1e-05
        %v640 = vrsqrt.pop %v639
        %v641 = vld [vmem:[%s299] sm:$0xff]
        %v642 = vmul.f32 %v640, %v641
        %v643 = vld [vmem:[%s306] sm:$0xff]
        %v644 = vmul.f32 %v633, %v642
        %v645 = vsub.f32 %v643, %v644
        %v646 = vld [vmem:[%s315] sm:$0xff]
        %v647 = vld [vmem:[%s315 + $0x8] sm:$0xff]
        %v648 = vld [vmem:[%s315 + $0x10] sm:$0xff]
        %v649 = vld [vmem:[%s315 + $0x18] sm:$0xff]
        %651 = vset.pattern.permute.xlu0 0
        %652 = vperm.xlu0 %651, %v642
        %v653 = vpop.permute.xlu0 %652
        %v655 = vmul.f32 %v646, %v653
        %v656 = vmul.f32 %v647, %v653
        %v657 = vmul.f32 %v648, %v653
        %v658 = vmul.f32 %v649, %v653
        %660 = vset.pattern.permute.xlu0 0
        %661 = vperm.xlu0 %660, %v645
        %v662 = vpop.permute.xlu0 %661
        %v664 = vadd.f32 %v655, %v662
        %v665 = vadd.f32 %v656, %v662
        %v666 = vadd.f32 %v657, %v662
        %v667 = vadd.f32 %v658, %v662
        %vm668 = vcmp.ge.f32.partialorder %v664, 0.0
        %vm669 = vcmp.ge.f32.partialorder %v665, 0.0
        %vm670 = vcmp.ge.f32.partialorder %v666, 0.0
        %vm671 = vcmp.ge.f32.partialorder %v667, 0.0
        %v672 = vmul.f32 %v664, 0.2
        %v673 = vmul.f32 %v665, 0.2
        %v674 = vmul.f32 %v666, 0.2
        %v675 = vmul.f32 %v667, 0.2
        %v676 = vsel %vm668, %v664, %v672
        %v677 = vsel %vm669, %v665, %v673
        %v678 = vsel %vm670, %v666, %v674
        %v679 = vsel %vm671, %v667, %v675
        %680 = vst [vmem:[%s315] sm:$0xff] %v676
        %681 = vst [vmem:[%s315 + $0x8] sm:$0xff] %v677
        %682 = vst [vmem:[%s315 + $0x10] sm:$0xff] %v678
        %683 = vst [vmem:[%s315 + $0x18] sm:$0xff] %v679
      $region44: #{conv_adain_block.1} parent=35 // pred_fallthru
        _
      %p684 = scmp.lt.s32.totalorder %s20, 1
      %s685 = scalar_select %p684, %s20, 1
      %p686 = scmp.lt.s32.totalorder %s21, 0
      %s687 = scalar_select %p686, %s21, 0
      %s688 = smul.addr %s687, 4
      %s689 = smul.addr %s685, 4
      %s690 = sadd.s32 %s688, %s689
      %s691 = smul.addr %s690, 8
      %s692 = scalar_lea.vmem %s4, %s691
      // Predicated region
      $region45: #{conv_adain_block.1} parent=35 // pred_check
        %p693 = pneg %p164
      $region46: #{conv_adain_block.1} parent=35 // pred_check_branch
        %695 = sbr.rel (%p693) target = $region48
      $region47: #{conv_adain_block.1} parent=35 // pred_region
        _
      $region48: #{conv_adain_block.1} parent=35 // pred_fallthru
        _
    $region36: #{conv_adain_block.1} parent=5 // pred_fallthru
      _
    %p696 = scmp.le.s32.totalorder 2, %s10
    // Predicated region
    $region49: #{conv_adain_block.1} parent=5 // pred_check
      %p697 = pneg %p696
    $region50: #{conv_adain_block.1} parent=5 // pred_check_branch
      %699 = sbr.rel (%p697) target = $region52
    $region51: #{conv_adain_block.1} parent=5 // pred_region
      %s700 = ssub.s32 %s10, 2
      // Predicated region
      $region53: #{conv_adain_block.1} parent=51 // pred_check
        %p701 = pneg %p170
      $region54: #{conv_adain_block.1} parent=51 // pred_check_branch
        %703 = sbr.rel (%p701) target = $region56
      $region55: #{conv_adain_block.1} parent=51 // pred_region
        %p704 = scmp.lt.s32.totalorder %s23, 1
        %s705 = scalar_select %p704, %s23, 1
        %p706 = scmp.lt.s32.totalorder %s24, 0
        %s707 = scalar_select %p706, %s24, 0
        %s708 = smul.addr %s707, 4
        %s709 = smul.addr %s705, 4
        %s710 = sadd.s32 %s708, %s709
        %s711 = smul.addr %s710, 8
        %s712 = scalar_lea.vmem %s4, %s711
      $region56: #{conv_adain_block.1} parent=51 // pred_fallthru
        _
    $region52: #{conv_adain_block.1} parent=5 // pred_fallthru
      _
  $region6: #{conv_adain_block.1} parent=0 // loop_footer
    %s14 = sadd.s32 1, %s10
  $region7: #{conv_adain_block.1} parent=0 // loop_footer_branch
    %9 = sbr.rel target = $region3
  $region8: #{conv_adain_block.1} parent=0 // loop_exit
    _

</llo_original>
